<compile_context>
chip_gen: v7x
topology: tpu7x:2x2x1
jax: 0.10.0
libtpu: 0.0.40
codegen_flags: <defaults>
</compile_context>

<pallas_src>
import itertools
import functools

import numpy as np
import jax
import jax.numpy as jnp
from jax.experimental import pallas as pl
from jax.experimental.pallas import tpu as pltpu


def _round_up(x: int, m: int) -> int:
    return (x + m - 1) // m * m


# ----------------------------------------------------------------------------
# Static monomial (Veronese) exponent table: all monomials of total degree <= d.
# ----------------------------------------------------------------------------
def monomial_exponents(n: int, d: int):
    """Returns a python list of lists, shape (M, n), graded order."""
    exps = []
    for total in range(d + 1):
        for combo in itertools.combinations_with_replacement(range(n), total):
            e = [0] * n
            for i in combo:
                e[i] += 1
            exps.append(e)
    return exps


# ----------------------------------------------------------------------------
# Fused Pallas kernel: build monomial rows for a batch of root vectors, then
# a single MXU contraction against the (pre-transposed, zero-padded) system.
# ----------------------------------------------------------------------------
def _make_kernel(n: int, d: int, b_pad: int, m_pad: int):
    def kernel(roots_ref, mask_ref, sysT_ref, out_ref):
        # roots_ref: (b_pad, n)       f32 VMEM  batch of root vectors (zero-padded rows)
        # mask_ref:  (n*d, m_pad)     f32 VMEM  {0,1} factor masks (padded cols are 0)
        # sysT_ref:  (m_pad, p_pad)   f32 VMEM  zero-padded system, transposed
        # out_ref:   (b_pad, p_pad)   f32 VMEM  rows 0..B-1 are the results
        roots = roots_ref[...]                                # (b_pad, n)
        mask = mask_ref[...]                                  # (n*d, m_pad)

        # Monomial rows via repeated multiply with precomputed factor masks:
        # factor = rk where mask==1 else 1  ==  1 + mask*(rk-1)   (pure VPU fma)
        mono = jnp.ones((b_pad, m_pad), jnp.float32)
        for k in range(n):                                    # static tiny loops
            rk = roots[:, k:k + 1]                            # (b_pad, 1)
            for e in range(d):
                row = k * d + e
                mrow = mask[row:row + 1, :]                   # (1, m_pad)
                mono = mono * (1.0 + mrow * (rk - 1.0))

        # Lane-dense contraction on the MXU: (b_pad, m_pad) @ (m_pad, p_pad).
        out_ref[...] = jnp.dot(mono, sysT_ref[...],
                               preferred_element_type=jnp.float32)

    return kernel


# ----------------------------------------------------------------------------
# Model wrapper: mirrors UnsupModel (precompute at init, thin jitted forward).
# ----------------------------------------------------------------------------
class UnsupModelPallas:
    def __init__(self, n: int, d: int, system, key, max_batch: int = 8):
        self.n, self.d = n, d
        system = np.asarray(system, dtype=np.float32)
        self.P, M_sys = system.shape

        exps = np.asarray(monomial_exponents(n, d), dtype=np.int32)  # (M, n)
        M = exps.shape[0]
        assert M == M_sys, (M, M_sys)
        self.M = M

        self.m_pad = _round_up(M, 128)
        self.p_pad = _round_up(self.P, 128)
        self.b_pad = _round_up(max(max_batch, 1), 8)

        # --- one-time host precompute (numpy), kept as device constants -----
        # f32 {0,1} factor-mask table: mask[k*d+(e-1), m] = 1 iff exps[m,k] >= e+0.
        mask = np.zeros((n * d, self.m_pad), dtype=np.float32)
        for k in range(n):
            for e in range(1, d + 1):
                mask[k * d + (e - 1), :M] = (exps[:, k] >= e).astype(np.float32)
        self.mask = jnp.asarray(mask)

        # Zero-padded, pre-transposed system: (M_pad, P_pad).  K-rows M..M_pad
        # MUST be exactly zero (padded mono columns evaluate to 1.0, not 0.0).
        sysT = np.zeros((self.m_pad, self.p_pad), dtype=np.float32)
        sysT[:M, :self.P] = system.T
        self.sysT = jnp.asarray(sysT)

        # Learned parameter, mirrors torch.rand(n).
        self.roots = jax.random.uniform(key, (n,), dtype=jnp.float32)

        # --- build the pallas_call once (shapes are static) -----------------
        kernel = _make_kernel(n, d, self.b_pad, self.m_pad)
        call = pl.pallas_call(
            kernel,
            out_shape=jax.ShapeDtypeStruct((self.b_pad, self.p_pad), jnp.float32),
            in_specs=[
                pl.BlockSpec(memory_space=pltpu.MemorySpace.VMEM),   # roots batch
                pl.BlockSpec(memory_space=pltpu.MemorySpace.VMEM),   # factor masks
                pl.BlockSpec(memory_space=pltpu.MemorySpace.VMEM),   # system^T
            ],
            out_specs=pl.BlockSpec(memory_space=pltpu.MemorySpace.VMEM),
        )

        n_, b_pad_, P_ = n, self.b_pad, self.P

        @jax.jit
        def _run(roots_batch, mask_c, sysT_c):
            B = roots_batch.shape[0]
            if B == b_pad_:
                rb = roots_batch
            else:
                rb = jnp.zeros((b_pad_, n_), jnp.float32).at[:B, :].set(roots_batch)
            out = call(rb, mask_c, sysT_c)
            return out[:B, :P_]

        self._run = _run

    # torch forward: (system @ resize_vector(roots[None]).T).squeeze() -> (P,)
    def forward(self):
        return self._run(self.roots[None, :], self.mask, self.sysT)[0]

    # batched evaluation of B candidate root vectors in one kernel call -> (B, P)
    def forward_batched(self, roots_batch):
        return self._run(roots_batch, self.mask, self.sysT)


# ----------------------------------------------------------------------------
# Demo / self-check
# ----------------------------------------------------------------------------
if __name__ == "__main__":
    key = jax.random.PRNGKey(0)
    k_roots, k_sys, k_batch = jax.random.split(key, 3)

    n, d = 4, 2                                  # 4 variables, degree <= 2
    exps_list = monomial_exponents(n, d)
    M = len(exps_list)                           # 15 monomials
    P = 16                                       # number of polynomials
    B = 8                                        # batched root sets per call

    system = jax.random.normal(k_sys, (P, M), dtype=jnp.float32)
    model = UnsupModelPallas(n, d, system, k_roots, max_batch=B)

    # Pure-JAX reference of the exact forward semantics.
    exps_f = jnp.asarray(exps_list, dtype=jnp.float32)                   # (M, n)

    def ref_forward(roots_vec):
        mono = jnp.prod(
            jnp.where(exps_f > 0, roots_vec[None, :] ** exps_f, jnp.float32(1.0)),
            axis=1)                                                      # (M,)
        return jnp.squeeze(system @ mono[:, None])                       # (P,)

    # --- single-root forward (mirrors UnsupModel.forward) -------------------
    out = jax.block_until_ready(model.forward())
    ref = ref_forward(model.roots)
    assert out.shape == (P,), out.shape
    assert jnp.allclose(out, ref, atol=1e-5, rtol=1e-5), (out, ref)

    # --- batched forward (B candidate root sets in one kernel call) ---------
    roots_batch = jax.random.uniform(k_batch, (B, n), dtype=jnp.float32)
    out_b = jax.block_until_ready(model.forward_batched(roots_batch))
    ref_b = jax.vmap(ref_forward)(roots_batch)
    assert out_b.shape == (B, P), out_b.shape
    assert jnp.allclose(out_b, ref_b, atol=1e-5, rtol=1e-5), (out_b, ref_b)

    print("KERNEL_OK")
</pallas_src>

<mosaic_0001>
module attributes {stable_mosaic.version = 11 : i64} {
  func.func @kernel(%arg0: memref<8x4xf32, #tpu.memory_space<vmem>>, %arg1: memref<8x128xf32, #tpu.memory_space<vmem>>, %arg2: memref<128x128xf32, #tpu.memory_space<vmem>>, %arg3: memref<8x128xf32, #tpu.memory_space<vmem>>) attributes {dimension_semantics = [], scalar_prefetch = 0 : i64, scratch_operands = 0 : i64, tpu.core_type = #tpu.core_type<tc>} {
    %c0 = arith.constant 0 : index
    %c0_0 = arith.constant 0 : index
    %0 = vector.load %arg0[%c0, %c0_0] : memref<8x4xf32, #tpu.memory_space<vmem>>, vector<8x4xf32>
    %c0_1 = arith.constant 0 : index
    %c0_2 = arith.constant 0 : index
    %1 = vector.load %arg1[%c0_1, %c0_2] : memref<8x128xf32, #tpu.memory_space<vmem>>, vector<8x128xf32>
    %cst = arith.constant 1.000000e+00 : f32
    %2 = vector.broadcast %cst : f32 to vector<8x128xf32>
    %3 = vector.extract_strided_slice %0 {offsets = [0, 0], sizes = [8, 1], strides = [1, 1]} : vector<8x4xf32> to vector<8x1xf32>
    %4 = vector.extract_strided_slice %1 {offsets = [0, 0], sizes = [1, 128], strides = [1, 1]} : vector<8x128xf32> to vector<1x128xf32>
    %cst_3 = arith.constant 1.000000e+00 : f32
    %5 = vector.broadcast %cst_3 : f32 to vector<8x1xf32>
    %6 = arith.subf %3, %5 : vector<8x1xf32>
    %7 = vector.broadcast %4 : vector<1x128xf32> to vector<8x128xf32>
    %8 = vector.broadcast %6 : vector<8x1xf32> to vector<8x128xf32>
    %9 = arith.mulf %7, %8 : vector<8x128xf32>
    %cst_4 = arith.constant 1.000000e+00 : f32
    %10 = vector.broadcast %cst_4 : f32 to vector<8x128xf32>
    %11 = arith.addf %10, %9 : vector<8x128xf32>
    %12 = arith.mulf %2, %11 : vector<8x128xf32>
    %13 = vector.extract_strided_slice %1 {offsets = [1, 0], sizes = [1, 128], strides = [1, 1]} : vector<8x128xf32> to vector<1x128xf32>
    %cst_5 = arith.constant 1.000000e+00 : f32
    %14 = vector.broadcast %cst_5 : f32 to vector<8x1xf32>
    %15 = arith.subf %3, %14 : vector<8x1xf32>
    %16 = vector.broadcast %13 : vector<1x128xf32> to vector<8x128xf32>
    %17 = vector.broadcast %15 : vector<8x1xf32> to vector<8x128xf32>
    %18 = arith.mulf %16, %17 : vector<8x128xf32>
    %cst_6 = arith.constant 1.000000e+00 : f32
    %19 = vector.broadcast %cst_6 : f32 to vector<8x128xf32>
    %20 = arith.addf %19, %18 : vector<8x128xf32>
    %21 = arith.mulf %12, %20 : vector<8x128xf32>
    %22 = vector.extract_strided_slice %0 {offsets = [0, 1], sizes = [8, 1], strides = [1, 1]} : vector<8x4xf32> to vector<8x1xf32>
    %23 = vector.extract_strided_slice %1 {offsets = [2, 0], sizes = [1, 128], strides = [1, 1]} : vector<8x128xf32> to vector<1x128xf32>
    %cst_7 = arith.constant 1.000000e+00 : f32
    %24 = vector.broadcast %cst_7 : f32 to vector<8x1xf32>
    %25 = arith.subf %22, %24 : vector<8x1xf32>
    %26 = vector.broadcast %23 : vector<1x128xf32> to vector<8x128xf32>
    %27 = vector.broadcast %25 : vector<8x1xf32> to vector<8x128xf32>
    %28 = arith.mulf %26, %27 : vector<8x128xf32>
    %cst_8 = arith.constant 1.000000e+00 : f32
    %29 = vector.broadcast %cst_8 : f32 to vector<8x128xf32>
    %30 = arith.addf %29, %28 : vector<8x128xf32>
    %31 = arith.mulf %21, %30 : vector<8x128xf32>
    %32 = vector.extract_strided_slice %1 {offsets = [3, 0], sizes = [1, 128], strides = [1, 1]} : vector<8x128xf32> to vector<1x128xf32>
    %cst_9 = arith.constant 1.000000e+00 : f32
    %33 = vector.broadcast %cst_9 : f32 to vector<8x1xf32>
    %34 = arith.subf %22, %33 : vector<8x1xf32>
    %35 = vector.broadcast %32 : vector<1x128xf32> to vector<8x128xf32>
    %36 = vector.broadcast %34 : vector<8x1xf32> to vector<8x128xf32>
    %37 = arith.mulf %35, %36 : vector<8x128xf32>
    %cst_10 = arith.constant 1.000000e+00 : f32
    %38 = vector.broadcast %cst_10 : f32 to vector<8x128xf32>
    %39 = arith.addf %38, %37 : vector<8x128xf32>
    %40 = arith.mulf %31, %39 : vector<8x128xf32>
    %41 = vector.extract_strided_slice %0 {offsets = [0, 2], sizes = [8, 1], strides = [1, 1]} : vector<8x4xf32> to vector<8x1xf32>
    %42 = vector.extract_strided_slice %1 {offsets = [4, 0], sizes = [1, 128], strides = [1, 1]} : vector<8x128xf32> to vector<1x128xf32>
    %cst_11 = arith.constant 1.000000e+00 : f32
    %43 = vector.broadcast %cst_11 : f32 to vector<8x1xf32>
    %44 = arith.subf %41, %43 : vector<8x1xf32>
    %45 = vector.broadcast %42 : vector<1x128xf32> to vector<8x128xf32>
    %46 = vector.broadcast %44 : vector<8x1xf32> to vector<8x128xf32>
    %47 = arith.mulf %45, %46 : vector<8x128xf32>
    %cst_12 = arith.constant 1.000000e+00 : f32
    %48 = vector.broadcast %cst_12 : f32 to vector<8x128xf32>
    %49 = arith.addf %48, %47 : vector<8x128xf32>
    %50 = arith.mulf %40, %49 : vector<8x128xf32>
    %51 = vector.extract_strided_slice %1 {offsets = [5, 0], sizes = [1, 128], strides = [1, 1]} : vector<8x128xf32> to vector<1x128xf32>
    %cst_13 = arith.constant 1.000000e+00 : f32
    %52 = vector.broadcast %cst_13 : f32 to vector<8x1xf32>
    %53 = arith.subf %41, %52 : vector<8x1xf32>
    %54 = vector.broadcast %51 : vector<1x128xf32> to vector<8x128xf32>
    %55 = vector.broadcast %53 : vector<8x1xf32> to vector<8x128xf32>
    %56 = arith.mulf %54, %55 : vector<8x128xf32>
    %cst_14 = arith.constant 1.000000e+00 : f32
    %57 = vector.broadcast %cst_14 : f32 to vector<8x128xf32>
    %58 = arith.addf %57, %56 : vector<8x128xf32>
    %59 = arith.mulf %50, %58 : vector<8x128xf32>
    %60 = vector.extract_strided_slice %0 {offsets = [0, 3], sizes = [8, 1], strides = [1, 1]} : vector<8x4xf32> to vector<8x1xf32>
    %61 = vector.extract_strided_slice %1 {offsets = [6, 0], sizes = [1, 128], strides = [1, 1]} : vector<8x128xf32> to vector<1x128xf32>
    %cst_15 = arith.constant 1.000000e+00 : f32
    %62 = vector.broadcast %cst_15 : f32 to vector<8x1xf32>
    %63 = arith.subf %60, %62 : vector<8x1xf32>
    %64 = vector.broadcast %61 : vector<1x128xf32> to vector<8x128xf32>
    %65 = vector.broadcast %63 : vector<8x1xf32> to vector<8x128xf32>
    %66 = arith.mulf %64, %65 : vector<8x128xf32>
    %cst_16 = arith.constant 1.000000e+00 : f32
    %67 = vector.broadcast %cst_16 : f32 to vector<8x128xf32>
    %68 = arith.addf %67, %66 : vector<8x128xf32>
    %69 = arith.mulf %59, %68 : vector<8x128xf32>
    %70 = vector.extract_strided_slice %1 {offsets = [7, 0], sizes = [1, 128], strides = [1, 1]} : vector<8x128xf32> to vector<1x128xf32>
    %cst_17 = arith.constant 1.000000e+00 : f32
    %71 = vector.broadcast %cst_17 : f32 to vector<8x1xf32>
    %72 = arith.subf %60, %71 : vector<8x1xf32>
    %73 = vector.broadcast %70 : vector<1x128xf32> to vector<8x128xf32>
    %74 = vector.broadcast %72 : vector<8x1xf32> to vector<8x128xf32>
    %75 = arith.mulf %73, %74 : vector<8x128xf32>
    %cst_18 = arith.constant 1.000000e+00 : f32
    %76 = vector.broadcast %cst_18 : f32 to vector<8x128xf32>
    %77 = arith.addf %76, %75 : vector<8x128xf32>
    %78 = arith.mulf %69, %77 : vector<8x128xf32>
    %c0_19 = arith.constant 0 : index
    %c0_20 = arith.constant 0 : index
    %79 = vector.load %arg2[%c0_19, %c0_20] : memref<128x128xf32, #tpu.memory_space<vmem>>, vector<128x128xf32>
    %cst_21 = arith.constant dense<0.000000e+00> : vector<8x128xf32>
    %80 = tpu.matmul %78, %79, %cst_21 {dimension_numbers = #tpu.dot_dimension_numbers<[1], [0], [0], [1], [0, 0, 1, 1], [], []>} : vector<8x128xf32>, vector<128x128xf32>, vector<8x128xf32> -> vector<8x128xf32>
    %c0_22 = arith.constant 0 : index
    %c0_23 = arith.constant 0 : index
    %81 = vector.load %arg3[%c0_22, %c0_23] : memref<8x128xf32, #tpu.memory_space<vmem>>, vector<8x128xf32>
    tpu.vector_store %arg3[%c0_22, %c0_23], %80 {strides = array<i32>} : memref<8x128xf32, #tpu.memory_space<vmem>>, vector<8x128xf32>,
    return
  }
}

</mosaic_0001>

<llo_original>
// kernel: _run.1
$region0: #{_run.1}
  #allocation0 [shape = 'u32[]', space=smem, size = 0x4, offset = 0x4, fixed_abs, tag = 'smem constant byte address 0x4 - core index']
  #allocation1 [shape = 'u32[144,128]{1,0:T(1,128)}', space=vmem, size = 0x12000, scoped, tag = 'internal scratch']
  %s0 = inlined_call_operand.vmem [shape: f32[8,4], index: 0, kind: input, shape index: {}]
  %s1 = inlined_call_operand.vmem [shape: f32[8,128], index: 1, kind: input, shape index: {}]
  %s2 = inlined_call_operand.hbm [shape: f32[128,128], index: 2, kind: input, shape index: {}]
  %s3 = inlined_call_operand.vmem [shape: f32[8,128], index: 3, kind: output, shape index: {}]
  %s4 = sld [smem:[#allocation0]]
  $region26: #{_run.1} parent=0
    _
  %s6 = ssub.s32 1, %s4
  %s7 = scalar_select 0, %s6, %s4
  $region1: #{_run.1} parent=0
    #allocation2 [shape = 'u8[65536]{0}', space=vmem, size = 0x10000, scoped, tag = 'input window, operand 2, single buffered']
    #allocation3 [shape = 's32[1]{0}', space=sflag, size = 0x4, scoped, tag = 'scoped memory for _run.1']
    %8 = vsyncpa [#allocation3], 0
    // Predicated region
    $region2: #{_run.1} parent=1 // pred_check
      _
    $region3: #{_run.1} parent=1 // pred_check_branch
      %10 = sbr.rel (0) target = $region5
    $region4: #{_run.1} parent=1 // pred_region
      _
    $region5: #{_run.1} parent=1 // pred_fallthru
      _
    // Predicated region
    $region6: #{_run.1} parent=1 // pred_check
      _
    $region7: #{_run.1} parent=1 // pred_check_branch
      %12 = sbr.rel (0) target = $region9
    $region8: #{_run.1} parent=1 // pred_region
      _
    $region9: #{_run.1} parent=1 // pred_fallthru
      _
    // Predicated region
    $region10: #{_run.1} parent=1 // pred_check
      _
    $region11: #{_run.1} parent=1 // pred_check_branch
      %14 = sbr.rel (0) target = $region13
    $region12: #{_run.1} parent=1 // pred_region
      %s16 = ssub.s32 2048, 2048
      %17 = vsyncadd [#allocation3], %s16
      %s18 = sshll.u32 [#allocation2], 4
      %s19 = int_to_ptr.vmem [resolvable:$true] %s18
      %24 = dma.hbm_to_vmem [thread:$0]  %s2, 2048, %s19, [#allocation3], 128, 128, 8
    $region13: #{_run.1} parent=1 // pred_fallthru
      _
    // Predicated region
    $region14: #{_run.1} parent=1 // pred_check
      _
    $region15: #{_run.1} parent=1 // pred_check_branch
      %26 = sbr.rel (0) target = $region17
    $region16: #{_run.1} parent=1 // pred_region
      %27 = dma.done [#allocation3], 2048
    $region17: #{_run.1} parent=1 // pred_fallthru
      _
    %v28 = vld [vmem:[%s0] sm:$0xff]
    %v29 = vld [vmem:[%s1] sm:$0xff]
    %v30 = vsub.f32 %v28, 1.0
    %v31 = vlaneseq
    %v32 = vshrl.u32 %v31, 7
    %v33 = vsub.s32 0, %v32
    %v34 = vrot.slane %v29, %v33
    %36 = vset.pattern.permute.xlu0 0
    %37 = vperm.xlu0 %36, %v30
    %v38 = vpop.permute.xlu0 %37
    %v40 = vmul.f32 %v34, %v38
    %v41 = vadd.f32 %v40, 1.0
    %v42 = vlaneseq
    %v43 = vshrl.u32 %v42, 7
    %v44 = vsub.s32 1, %v43
    %v45 = vrot.slane %v29, %v44
    %v46 = vmul.f32 %v45, %v38
    %v47 = vadd.f32 %v46, 1.0
    %v48 = vmul.f32 %v41, %v47
    %v49 = vlaneseq
    %v50 = vshrl.u32 %v49, 7
    %v51 = vsub.s32 2, %v50
    %v52 = vrot.slane %v29, %v51
    %53 = vset.pattern.permute.xlu0 1
    %54 = vperm.xlu0 %53, %v30
    %v55 = vpop.permute.xlu0 %54
    %v57 = vmul.f32 %v52, %v55
    %v58 = vadd.f32 %v57, 1.0
    %v59 = vmul.f32 %v48, %v58
    %v60 = vlaneseq
    %v61 = vshrl.u32 %v60, 7
    %v62 = vsub.s32 3, %v61
    %v63 = vrot.slane %v29, %v62
    %v64 = vmul.f32 %v63, %v55
    %v65 = vadd.f32 %v64, 1.0
    %v66 = vmul.f32 %v59, %v65
    %v67 = vlaneseq
    %v68 = vshrl.u32 %v67, 7
    %v69 = vsub.s32 4, %v68
    %v70 = vrot.slane %v29, %v69
    %71 = vset.pattern.permute.xlu0 2
    %72 = vperm.xlu0 %71, %v30
    %v73 = vpop.permute.xlu0 %72
    %v75 = vmul.f32 %v70, %v73
    %v76 = vadd.f32 %v75, 1.0
    %v77 = vmul.f32 %v66, %v76
    %v78 = vlaneseq
    %v79 = vshrl.u32 %v78, 7
    %v80 = vsub.s32 5, %v79
    %v81 = vrot.slane %v29, %v80
    %v82 = vmul.f32 %v81, %v73
    %v83 = vadd.f32 %v82, 1.0
    %v84 = vmul.f32 %v77, %v83
    %v85 = vlaneseq
    %v86 = vshrl.u32 %v85, 7
    %v87 = vsub.s32 6, %v86
    %v88 = vrot.slane %v29, %v87
    %89 = vset.pattern.permute.xlu0 3
    %90 = vperm.xlu0 %89, %v30
    %v91 = vpop.permute.xlu0 %90
    %v93 = vmul.f32 %v88, %v91
    %v94 = vadd.f32 %v93, 1.0
    %v95 = vmul.f32 %v84, %v94
    %v96 = vlaneseq
    %v97 = vshrl.u32 %v96, 7
    %v98 = vsub.s32 7, %v97
    %v99 = vrot.slane %v29, %v98
    %v100 = vmul.f32 %v99, %v91
    %v101 = vadd.f32 %v100, 1.0
    %v102 = vmul.f32 %v95, %v101
    %v103 = vld [vmem:[#allocation2] sm:$0xff]
    %v104 = vld [vmem:[#allocation2 + $0x8] sm:$0xff]
    %v105 = vld [vmem:[#allocation2 + $0x10] sm:$0xff]
    %v106 = vld [vmem:[#allocation2 + $0x18] sm:$0xff]
    %v107 = vld [vmem:[#allocation2 + $0x20] sm:$0xff]
    %v108 = vld [vmem:[#allocation2 + $0x28] sm:$0xff]
    %v109 = vld [vmem:[#allocation2 + $0x30] sm:$0xff]
    %v110 = vld [vmem:[#allocation2 + $0x38] sm:$0xff]
    %v111 = vld [vmem:[#allocation2 + $0x40] sm:$0xff]
    %v112 = vld [vmem:[#allocation2 + $0x48] sm:$0xff]
    %v113 = vld [vmem:[#allocation2 + $0x50] sm:$0xff]
    %v114 = vld [vmem:[#allocation2 + $0x58] sm:$0xff]
    %v115 = vld [vmem:[#allocation2 + $0x60] sm:$0xff]
    %v116 = vld [vmem:[#allocation2 + $0x68] sm:$0xff]
    %v117 = vld [vmem:[#allocation2 + $0x70] sm:$0xff]
    %v118 = vld [vmem:[#allocation2 + $0x78] sm:$0xff]
    %119 = vmatprep.subr.mxu0 0.0
    %120 = vmatpush1.msra.mxu0 %v103
    %121 = vmatprep.subr.mxu0 0.0
    %122 = vmatpush1.msra.mxu0 %v104
    %123 = vmatprep.subr.mxu0 0.0
    %124 = vmatpush1.msra.mxu0 %v105
    %125 = vmatprep.subr.mxu0 0.0
    %126 = vmatpush1.msra.mxu0 %v106
    %127 = vmatprep.subr.mxu0 0.0
    %128 = vmatpush1.msra.mxu0 %v107
    %129 = vmatprep.subr.mxu0 0.0
    %130 = vmatpush1.msra.mxu0 %v108
    %131 = vmatprep.subr.mxu0 0.0
    %132 = vmatpush1.msra.mxu0 %v109
    %133 = vmatprep.subr.mxu0 0.0
    %134 = vmatpush1.msra.mxu0 %v110
    %135 = vmatprep.subr.mxu0 0.0
    %136 = vmatpush1.msra.mxu0 %v111
    %137 = vmatprep.subr.mxu0 0.0
    %138 = vmatpush1.msra.mxu0 %v112
    %139 = vmatprep.subr.mxu0 0.0
    %140 = vmatpush1.msra.mxu0 %v113
    %141 = vmatprep.subr.mxu0 0.0
    %142 = vmatpush1.msra.mxu0 %v114
    %143 = vmatprep.subr.mxu0 0.0
    %144 = vmatpush1.msra.mxu0 %v115
    %145 = vmatprep.subr.mxu0 0.0
    %146 = vmatpush1.msra.mxu0 %v116
    %147 = vmatprep.subr.mxu0 0.0
    %148 = vmatpush1.msra.mxu0 %v117
    %149 = vmatprep.subr.mxu0 0.0
    %150 = vmatpush1.msra.mxu0 %v118
    %151 = vmatprep.subr.mxu0 0.0
    %152 = vmatpush1.msra.mxu0 0.0
    %153 = vmatprep.subr.mxu0 0.0
    %154 = vmatpush1.msra.mxu0 0.0
    %155 = vmatprep.subr.mxu0 0.0
    %156 = vmatpush1.msra.mxu0 0.0
    %157 = vmatprep.subr.mxu0 0.0
    %158 = vmatpush1.msra.mxu0 0.0
    %159 = vmatprep.subr.mxu0 0.0
    %160 = vmatpush1.msra.mxu0 0.0
    %161 = vmatprep.subr.mxu0 0.0
    %162 = vmatpush1.msra.mxu0 0.0
    %163 = vmatprep.subr.mxu0 0.0
    %164 = vmatpush1.msra.mxu0 0.0
    %165 = vmatprep.subr.mxu0 0.0
    %166 = vmatpush1.msra.mxu0 0.0
    %167 = vmatprep.subr.mxu0 0.0
    %168 = vmatpush1.msra.mxu0 0.0
    %169 = vmatprep.subr.mxu0 0.0
    %170 = vmatpush1.msra.mxu0 0.0
    %171 = vmatprep.subr.mxu0 0.0
    %172 = vmatpush1.msra.mxu0 0.0
    %173 = vmatprep.subr.mxu0 0.0
    %174 = vmatpush1.msra.mxu0 0.0
    %175 = vmatprep.subr.mxu0 0.0
    %176 = vmatpush1.msra.mxu0 0.0
    %177 = vmatprep.subr.mxu0 0.0
    %178 = vmatpush1.msra.mxu0 0.0
    %179 = vmatprep.subr.mxu0 0.0
    %180 = vmatpush1.msra.mxu0 0.0
    %181 = vmatprep.subr.mxu0 0.0
    %182 = vmatpush1.msra.mxu0 0.0
    %183 = vmatprep.mubr.f32.mxu0 0.0
    %184 = vmatmul.mubr.f32.gmra.mrb[0].mxu0 %v102
    %v185 = vpop.f32.mrb[0].mxu0
    %v186 = vadd.f32 0.0, %v185
    %v187 = vpop.f32.mrb[0].mxu0
    %188 = vdwg.mxu0
    %189 = vst [vmem:[%s3] sm:$0xff] %v186
    // Predicated region
    $region18: #{_run.1} parent=1 // pred_check
      _
    $region19: #{_run.1} parent=1 // pred_check_branch
      %191 = sbr.rel (0) target = $region21
    $region20: #{_run.1} parent=1 // pred_region
      _
    $region21: #{_run.1} parent=1 // pred_fallthru
      _
    // Predicated region
    $region22: #{_run.1} parent=1 // pred_check
      _
    $region23: #{_run.1} parent=1 // pred_check_branch
      %193 = sbr.rel (0) target = $region25
    $region24: #{_run.1} parent=1 // pred_region
      _
    $region25: #{_run.1} parent=1 // pred_fallthru
      _
    %194 = vsyncpa [#allocation3], 1

</llo_original>
